<compile_context>
chip_gen: v7x
topology: tpu7x:2x2x1
jax: 0.10.0
libtpu: 0.0.40
codegen_flags: <defaults>
</compile_context>

<pallas_src>
import functools

import jax
import jax.numpy as jnp
from jax.experimental import pallas as pl
from jax.experimental.pallas import tpu as pltpu


def _concat_cbl_kernel(x1_ref, x2_ref, w_ref, b_ref, o_ref, *, c):
    # x1_ref: (1, C, tl)   x2_ref: (1, 2C, tl)   w_ref: (C, 2C)   b_ref: (C, 1)
    # 1x1 conv with BN scale pre-folded into w: (C, 2C) @ (2C, tl), HW on lanes.
    y = jnp.dot(w_ref[...], x2_ref[0], preferred_element_type=jnp.float32)
    y = y + b_ref[...]                      # folded BatchNorm bias
    y = jnp.where(y >= 0.0, y, 0.1 * y)     # LeakyReLU(0.1)
    # Channel concat == row-range writes at full lane width (unmasked vst).
    o_ref[0, :c, :] = x1_ref[0].astype(o_ref.dtype)
    o_ref[0, c:, :] = y.astype(o_ref.dtype)


def concat_forward(x1_nchw, x2_nchw, conv_w, gamma, beta, run_mean, run_var,
                   eps=1e-5, max_tl=2048):
    """x1: (N, C, H, W), x2: (N, 2C, H, W), conv_w: (C, 2C, 1, 1). Returns (N, 2C, H, W)."""
    N, C, H, W = x1_nchw.shape
    assert x2_nchw.shape == (N, 2 * C, H, W)
    HW = H * W

    # Keep NCHW; flatten spatial only (pure reshape, no transpose / extra HBM pass).
    x1 = x1_nchw.reshape(N, C, HW)
    x2 = x2_nchw.reshape(N, 2 * C, HW)

    # Fold eval-mode BatchNorm scale into the 1x1 conv weight; only a bias remains.
    inv_std = 1.0 / jnp.sqrt(run_var + eps)
    scale = gamma * inv_std                              # (C,)
    w = conv_w.reshape(C, 2 * C) * scale[:, None]        # (C_out, C_in), BN-scaled
    bias = (beta - run_mean * scale).reshape(C, 1)       # broadcast over lanes

    # Large lane tile over H*W (128-aligned); tail blocks are masked by Pallas,
    # so HW need not divide the tile.  VMEM per step (double-buffered) is
    # ~2 * 5*C*tl*4 bytes, far below the scoped limit for realistic C.
    tl = min(max_tl, pl.cdiv(HW, 128) * 128)
    grid = (N, pl.cdiv(HW, tl))

    out = pl.pallas_call(
        functools.partial(_concat_cbl_kernel, c=C),
        out_shape=jax.ShapeDtypeStruct((N, 2 * C, HW), x1.dtype),
        grid_spec=pltpu.PrefetchScalarGridSpec(
            num_scalar_prefetch=0,
            grid=grid,
            in_specs=[
                pl.BlockSpec((1, C, tl), lambda n, j: (n, 0, j)),       # x1 tile
                pl.BlockSpec((1, 2 * C, tl), lambda n, j: (n, 0, j)),   # x2 tile
                pl.BlockSpec((C, 2 * C), lambda n, j: (0, 0)),          # folded conv weight (resident)
                pl.BlockSpec((C, 1), lambda n, j: (0, 0)),              # BN bias (resident)
            ],
            out_specs=pl.BlockSpec((1, 2 * C, tl), lambda n, j: (n, 0, j)),
        ),
        compiler_params=pltpu.CompilerParams(
            dimension_semantics=("parallel", "parallel")),
    )(x1, x2, w, bias)

    return out.reshape(N, 2 * C, H, W)


def concat_reference(x1, x2, conv_w, gamma, beta, run_mean, run_var, eps=1e-5):
    """Pure-JAX reference mirroring the PyTorch module (eval-mode BN)."""
    N, C, H, W = x1.shape
    w2d = conv_w.reshape(C, 2 * C)                       # (C_out, C_in)
    y = jnp.einsum('nchw,oc->nohw', x2, w2d)             # 1x1 conv, no bias
    inv_std = 1.0 / jnp.sqrt(run_var + eps)
    y = (y - run_mean[None, :, None, None]) * (gamma * inv_std)[None, :, None, None] \
        + beta[None, :, None, None]
    y = jnp.where(y >= 0.0, y, 0.1 * y)
    return jnp.concatenate([x1, y], axis=1)


def _run_case(key, N, C, H, W):
    k1, k2, k3, k4, k5, k6, k7 = jax.random.split(key, 7)
    x1 = jax.random.normal(k1, (N, C, H, W), dtype=jnp.float32)
    x2 = jax.random.normal(k2, (N, 2 * C, H, W), dtype=jnp.float32)
    conv_w = 0.1 * jax.random.normal(k3, (C, 2 * C, 1, 1), dtype=jnp.float32)
    gamma = 1.0 + 0.1 * jax.random.normal(k4, (C,), dtype=jnp.float32)
    beta = 0.1 * jax.random.normal(k5, (C,), dtype=jnp.float32)
    run_mean = 0.1 * jax.random.normal(k6, (C,), dtype=jnp.float32)
    run_var = jnp.abs(1.0 + 0.1 * jax.random.normal(k7, (C,), dtype=jnp.float32))

    out = concat_forward(x1, x2, conv_w, gamma, beta, run_mean, run_var)
    out = jax.block_until_ready(out)
    ref = concat_reference(x1, x2, conv_w, gamma, beta, run_mean, run_var)
    assert out.shape == (N, 2 * C, H, W)
    assert jnp.allclose(out, ref, atol=1e-4, rtol=1e-4), "mismatch vs reference"


if __name__ == "__main__":
    key = jax.random.PRNGKey(0)
    k_a, k_b = jax.random.split(key)
    # Main case: lane-aligned spatial extent.
    _run_case(k_a, N=2, C=8, H=16, W=16)
    # Ragged spatial extent (H*W not a multiple of 128) exercises masked tail blocks.
    _run_case(k_b, N=2, C=8, H=10, W=10)
    print("KERNEL_OK")
</pallas_src>

<mosaic_0001>
module attributes {stable_mosaic.version = 11 : i64} {
  func.func @_concat_cbl_kernel(%arg0: i32, %arg1: i32, %arg2: memref<1x8x256xf32, #tpu.memory_space<vmem>>, %arg3: memref<1x16x256xf32, #tpu.memory_space<vmem>>, %arg4: memref<8x16xf32, #tpu.memory_space<vmem>>, %arg5: memref<8x1xf32, #tpu.memory_space<vmem>>, %arg6: memref<1x16x256xf32, #tpu.memory_space<vmem>>) attributes {dimension_semantics = [#tpu.dimension_semantics<parallel>, #tpu.dimension_semantics<parallel>], iteration_bounds = array<i64: 2, 1>, scalar_prefetch = 0 : i64, scratch_operands = 0 : i64, tpu.core_type = #tpu.core_type<tc>, window_params = [{transform_indices = @transform_0, window_bounds = array<i64: 1, 8, 256>}, {transform_indices = @transform_1, window_bounds = array<i64: 1, 16, 256>}, {pipeline_mode = #tpu.pipeline_mode<synchronous>, transform_indices = @transform_2, window_bounds = array<i64: 8, 16>}, {pipeline_mode = #tpu.pipeline_mode<synchronous>, transform_indices = @transform_3, window_bounds = array<i64: 8, 1>}, {transform_indices = @transform_4, window_bounds = array<i64: 1, 16, 256>}]} {
    %c0 = arith.constant 0 : index
    %c0_0 = arith.constant 0 : index
    %0 = vector.load %arg4[%c0, %c0_0] : memref<8x16xf32, #tpu.memory_space<vmem>>, vector<8x16xf32>
    %c0_1 = arith.constant 0 : index
    %c0_2 = arith.constant 0 : index
    %c0_3 = arith.constant 0 : index
    %1 = vector.load %arg3[%c0_1, %c0_2, %c0_3] : memref<1x16x256xf32, #tpu.memory_space<vmem>>, vector<1x16x256xf32>
    %2 = vector.shape_cast %1 : vector<1x16x256xf32> to vector<16x256xf32>
    %cst = arith.constant dense<0.000000e+00> : vector<8x256xf32>
    %3 = tpu.matmul %0, %2, %cst {dimension_numbers = #tpu.dot_dimension_numbers<[1], [0], [0], [1], [0, 0, 1, 1], [], []>} : vector<8x16xf32>, vector<16x256xf32>, vector<8x256xf32> -> vector<8x256xf32>
    %c0_4 = arith.constant 0 : index
    %c0_5 = arith.constant 0 : index
    %4 = vector.load %arg5[%c0_4, %c0_5] : memref<8x1xf32, #tpu.memory_space<vmem>>, vector<8x1xf32>
    %5 = vector.broadcast %4 : vector<8x1xf32> to vector<8x256xf32>
    %6 = arith.addf %3, %5 : vector<8x256xf32>
    %cst_6 = arith.constant 0.000000e+00 : f32
    %7 = vector.broadcast %cst_6 : f32 to vector<8x256xf32>
    %8 = arith.cmpf oge, %6, %7 : vector<8x256xf32>
    %cst_7 = arith.constant 1.000000e-01 : f32
    %9 = vector.broadcast %cst_7 : f32 to vector<8x256xf32>
    %10 = arith.mulf %9, %6 : vector<8x256xf32>
    %11 = arith.select %8, %6, %10 : vector<8x256xi1>, vector<8x256xf32>
    %c0_8 = arith.constant 0 : index
    %c0_9 = arith.constant 0 : index
    %c0_10 = arith.constant 0 : index
    %12 = vector.load %arg2[%c0_8, %c0_9, %c0_10] : memref<1x8x256xf32, #tpu.memory_space<vmem>>, vector<1x8x256xf32>
    %13 = vector.shape_cast %12 : vector<1x8x256xf32> to vector<8x256xf32>
    %c0_11 = arith.constant 0 : index
    %c0_12 = arith.constant 0 : index
    %c0_13 = arith.constant 0 : index
    %14 = vector.load %arg6[%c0_11, %c0_12, %c0_13] : memref<1x16x256xf32, #tpu.memory_space<vmem>>, vector<1x8x256xf32>
    %15 = vector.shape_cast %14 : vector<1x8x256xf32> to vector<8x256xf32>
    %16 = vector.shape_cast %13 : vector<8x256xf32> to vector<1x8x256xf32>
    tpu.vector_store %arg6[%c0_11, %c0_12, %c0_13], %16 {strides = array<i32>} : memref<1x16x256xf32, #tpu.memory_space<vmem>>, vector<1x8x256xf32>,
    %c0_14 = arith.constant 0 : index
    %c8 = arith.constant 8 : index
    %c0_15 = arith.constant 0 : index
    %17 = vector.load %arg6[%c0_14, %c8, %c0_15] : memref<1x16x256xf32, #tpu.memory_space<vmem>>, vector<1x8x256xf32>
    %18 = vector.shape_cast %17 : vector<1x8x256xf32> to vector<8x256xf32>
    %19 = vector.shape_cast %11 : vector<8x256xf32> to vector<1x8x256xf32>
    tpu.vector_store %arg6[%c0_14, %c8, %c0_15], %19 {strides = array<i32>} : memref<1x16x256xf32, #tpu.memory_space<vmem>>, vector<1x8x256xf32>,
    return
  }
  func.func @transform_0(%arg0: i32, %arg1: i32) -> (i32, i32, i32) {
    %c0_i32 = arith.constant 0 : i32
    %c0_i32_0 = arith.constant 0 : i32
    return %arg0, %c0_i32, %arg1 : i32, i32, i32
  }
  func.func @transform_1(%arg0: i32, %arg1: i32) -> (i32, i32, i32) {
    %c0_i32 = arith.constant 0 : i32
    %c0_i32_0 = arith.constant 0 : i32
    return %arg0, %c0_i32, %arg1 : i32, i32, i32
  }
  func.func @transform_2(%arg0: i32, %arg1: i32) -> (i32, i32) {
    %c0_i32 = arith.constant 0 : i32
    %c0_i32_0 = arith.constant 0 : i32
    %c0_i32_1 = arith.constant 0 : i32
    return %c0_i32, %c0_i32_0 : i32, i32
  }
  func.func @transform_3(%arg0: i32, %arg1: i32) -> (i32, i32) {
    %c0_i32 = arith.constant 0 : i32
    %c0_i32_0 = arith.constant 0 : i32
    %c0_i32_1 = arith.constant 0 : i32
    return %c0_i32, %c0_i32_0 : i32, i32
  }
  func.func @transform_4(%arg0: i32, %arg1: i32) -> (i32, i32, i32) {
    %c0_i32 = arith.constant 0 : i32
    %c0_i32_0 = arith.constant 0 : i32
    return %arg0, %c0_i32, %arg1 : i32, i32, i32
  }
}

</mosaic_0001>

<llo_original>
// kernel: tpu_custom_call.1
$region0: #{tpu_custom_call.1}
  #allocation0 [shape = 'u32[]', space=smem, size = 0x4, offset = 0x4, fixed_abs, tag = 'smem constant byte address 0x4 - core index']
  #allocation1 [shape = 'u32[144,128]{1,0:T(1,128)}', space=vmem, size = 0x12000, scoped, tag = 'internal scratch']
  %s0 = inlined_call_operand.hbm [shape: f32[2,8,256], index: 0, kind: input, shape index: {}]
  %s1 = inlined_call_operand.hbm [shape: f32[2,16,256], index: 1, kind: input, shape index: {}]
  %s2 = inlined_call_operand.vmem [shape: f32[8,16], index: 2, kind: input, shape index: {}]
  %s3 = inlined_call_operand.vmem [shape: f32[8,1], index: 3, kind: input, shape index: {}]
  %s4 = inlined_call_operand.hbm [shape: f32[2,16,256], index: 4, kind: output, shape index: {}]
  %s5 = sld [smem:[#allocation0]]
  $region57: #{tpu_custom_call.1} parent=0
    _
  %s7 = ssub.s32 1, %s5
  %s8 = scalar_select 0, %s7, %s5
  $region1: #{tpu_custom_call.1} parent=0
    #allocation2 [shape = 'u8[16384]{0}', space=vmem, size = 0x4000, scoped, tag = 'input window, operand 0']
    #allocation3 [shape = 's32[2]{0}', space=sflag, size = 0x8, scoped, tag = 'scoped memory for tpu_custom_call.1']
    #allocation4 [shape = 's32[2]{0}', space=sflag, size = 0x8, scoped, tag = 'scoped memory for tpu_custom_call.1']
    #allocation5 [shape = 'u8[32768]{0}', space=vmem, size = 0x8000, scoped, tag = 'input window, operand 1']
    #allocation6 [shape = 's32[2]{0}', space=sflag, size = 0x8, scoped, tag = 'scoped memory for tpu_custom_call.1']
    #allocation7 [shape = 'u8[32768]{0}', space=vmem, size = 0x8000, scoped, tag = 'output window, operand 0']
    %9 = vsyncpa [#allocation3], 0
    %s10 = scalar_lea.sflag [#allocation3], 1
    %11 = vsyncpa %s10, 0
    %12 = vsyncpa [#allocation6], 0
    %s13 = scalar_lea.sflag [#allocation6], 1
    %14 = vsyncpa %s13, 0
    %15 = vsyncpa [#allocation4], 0
    %s16 = scalar_lea.sflag [#allocation4], 1
    %17 = vsyncpa %s16, 0
    loop: start=0, step=1, limit=4
    $region2: #{tpu_custom_call.1} parent=1 // loop_pre_header
      _
    $region3: #{tpu_custom_call.1} parent=1 // loop_header
      %s19 = sphi 0, %s23
      %p20 = scmp.ge.s32.totalorder %s19, 4
      %s26 = sphi 0, %s38
      %s27 = sphi 0, %s34
      %s28 = sphi 0, %s26
      %s29 = sphi 0, %s27
      %s30 = sphi 0, %s28
      %s31 = sphi 0, %s29
      %s43 = sphi 0, %s45
      %s46 = sphi 0, %s43
      %s47 = sphi 0, %s46
      %s63 = sphi 0, %s47
      %s71 = sphi 0, %s73
      %s74 = sphi 0, %s71
      %s75 = sphi 0, %s74
      %s91 = sphi 0, %s75
      %s95 = sphi 0, %s95
      %s97 = sphi 0, %s95
      %s98 = sphi 0, %s97
      %s112 = sphi 0, %s98
      %s116 = sphi 0, %s116
      %s118 = sphi 0, %s116
      %s119 = sphi 0, %s118
      %s133 = sphi 0, %s119
      %s141 = sphi 0, %s143
      %s144 = sphi 0, %s141
      %s145 = sphi 0, %s144
      %s161 = sphi 0, %s145
    $region4: #{tpu_custom_call.1} parent=1 // loop_header_branch
      %22 = sbr.rel (%p20) target = $region8
    $region5: #{tpu_custom_call.1} parent=1 // loop_body
      %s24 = ssub.s32 %s19, 1
      %s25 = ssub.s32 %s19, 2
      %s32 = sadd.s32 1, %s27
      %p33 = scmp.ge.s32.totalorder %s32, 1
      %s34 = scalar_select %p33, 0, %s32
      %s35 = sadd.s32 1, %s26
      %s36 = scalar_select %p33, %s35, %s26
      %p37 = scmp.ge.s32.totalorder %s36, 2
      %s38 = scalar_select %p37, 0, %s36
      %s39 = ssub.s32 %s26, %s38
      %s40 = ssub.s32 %s27, %s34
      %s41 = sor.u32 %s39, %s40
      %p42 = scmp.eq.s32.totalorder %s41, 0
      %s44 = sadd.s32 %s43, 1
      %s45 = scalar_select %p42, %s43, %s44
      %p48 = pneg %p42
      %p49 = scmp.eq.s32.totalorder %s19, 1
      %p50 = por %p48, %p49
      %p51 = scmp.ne.s32.totalorder %s43, %s46
      %p52 = scmp.eq.s32.totalorder %s19, 0
      %p53 = por %p51, %p52
      %p54 = scmp.ne.s32.totalorder %s43, %s46
      %p55 = scmp.eq.s32.totalorder %s24, 1
      %p56 = por %p54, %p55
      %p57 = scmp.ne.s32.totalorder %s46, %s47
      %p58 = scmp.eq.s32.totalorder %s24, 0
      %p59 = por %p57, %p58
      %p60 = scmp.ne.s32.totalorder %s46, %s47
      %p61 = scmp.eq.s32.totalorder %s25, 1
      %p62 = por %p60, %p61
      %p64 = scmp.ne.s32.totalorder %s47, %s63
      %p65 = scmp.eq.s32.totalorder %s25, 0
      %p66 = por %p64, %p65
      %s67 = ssub.s32 %s26, %s38
      %s68 = ssub.s32 %s27, %s34
      %s69 = sor.u32 %s67, %s68
      %p70 = scmp.eq.s32.totalorder %s69, 0
      %s72 = sadd.s32 %s71, 1
      %s73 = scalar_select %p70, %s71, %s72
      %p76 = pneg %p70
      %p77 = scmp.eq.s32.totalorder %s19, 1
      %p78 = por %p76, %p77
      %p79 = scmp.ne.s32.totalorder %s71, %s74
      %p80 = scmp.eq.s32.totalorder %s19, 0
      %p81 = por %p79, %p80
      %p82 = scmp.ne.s32.totalorder %s71, %s74
      %p83 = scmp.eq.s32.totalorder %s24, 1
      %p84 = por %p82, %p83
      %p85 = scmp.ne.s32.totalorder %s74, %s75
      %p86 = scmp.eq.s32.totalorder %s24, 0
      %p87 = por %p85, %p86
      %p88 = scmp.ne.s32.totalorder %s74, %s75
      %p89 = scmp.eq.s32.totalorder %s25, 1
      %p90 = por %p88, %p89
      %p92 = scmp.ne.s32.totalorder %s75, %s91
      %p93 = scmp.eq.s32.totalorder %s25, 0
      %p94 = por %p92, %p93
      %s96 = sadd.s32 %s95, 1
      %p99 = scmp.eq.s32.totalorder %s19, 1
      %p100 = scmp.ne.s32.totalorder %s95, %s97
      %p101 = scmp.eq.s32.totalorder %s19, 0
      %p102 = por %p100, %p101
      %p103 = scmp.ne.s32.totalorder %s95, %s97
      %p104 = scmp.eq.s32.totalorder %s24, 1
      %p105 = por %p103, %p104
      %p106 = scmp.ne.s32.totalorder %s97, %s98
      %p107 = scmp.eq.s32.totalorder %s24, 0
      %p108 = por %p106, %p107
      %p109 = scmp.ne.s32.totalorder %s97, %s98
      %p110 = scmp.eq.s32.totalorder %s25, 1
      %p111 = por %p109, %p110
      %p113 = scmp.ne.s32.totalorder %s98, %s112
      %p114 = scmp.eq.s32.totalorder %s25, 0
      %p115 = por %p113, %p114
      %s117 = sadd.s32 %s116, 1
      %p120 = scmp.eq.s32.totalorder %s19, 1
      %p121 = scmp.ne.s32.totalorder %s116, %s118
      %p122 = scmp.eq.s32.totalorder %s19, 0
      %p123 = por %p121, %p122
      %p124 = scmp.ne.s32.totalorder %s116, %s118
      %p125 = scmp.eq.s32.totalorder %s24, 1
      %p126 = por %p124, %p125
      %p127 = scmp.ne.s32.totalorder %s118, %s119
      %p128 = scmp.eq.s32.totalorder %s24, 0
      %p129 = por %p127, %p128
      %p130 = scmp.ne.s32.totalorder %s118, %s119
      %p131 = scmp.eq.s32.totalorder %s25, 1
      %p132 = por %p130, %p131
      %p134 = scmp.ne.s32.totalorder %s119, %s133
      %p135 = scmp.eq.s32.totalorder %s25, 0
      %p136 = por %p134, %p135
      %s137 = ssub.s32 %s26, %s38
      %s138 = ssub.s32 %s27, %s34
      %s139 = sor.u32 %s137, %s138
      %p140 = scmp.eq.s32.totalorder %s139, 0
      %s142 = sadd.s32 %s141, 1
      %s143 = scalar_select %p140, %s141, %s142
      %p146 = pneg %p140
      %p147 = scmp.eq.s32.totalorder %s19, 1
      %p148 = por %p146, %p147
      %p149 = scmp.ne.s32.totalorder %s141, %s144
      %p150 = scmp.eq.s32.totalorder %s19, 0
      %p151 = por %p149, %p150
      %p152 = scmp.ne.s32.totalorder %s141, %s144
      %p153 = scmp.eq.s32.totalorder %s24, 1
      %p154 = por %p152, %p153
      %p155 = scmp.ne.s32.totalorder %s144, %s145
      %p156 = scmp.eq.s32.totalorder %s24, 0
      %p157 = por %p155, %p156
      %p158 = scmp.ne.s32.totalorder %s144, %s145
      %p159 = scmp.eq.s32.totalorder %s25, 1
      %p160 = por %p158, %p159
      %p162 = scmp.ne.s32.totalorder %s145, %s161
      %p163 = scmp.eq.s32.totalorder %s25, 0
      %p164 = por %p162, %p163
      %p165 = scmp.le.s32.totalorder 1, %s19
      %p166 = scmp.lt.s32.totalorder %s19, 3
      %p167 = pnand %p165, %p166
      %p168 = pneg %p167
      // Predicated region
      $region9: #{tpu_custom_call.1} parent=5 // pred_check
        _
      $region10: #{tpu_custom_call.1} parent=5 // pred_check_branch
        %170 = sbr.rel (%p167) target = $region12
      $region11: #{tpu_custom_call.1} parent=5 // pred_region
        %s171 = ssub.s32 %s19, 1
        // Predicated region
        $region13: #{tpu_custom_call.1} parent=11 // pred_check
          %p172 = pneg %p108
        $region14: #{tpu_custom_call.1} parent=11 // pred_check_branch
          %174 = sbr.rel (%p172) target = $region16
        $region15: #{tpu_custom_call.1} parent=11 // pred_region
          _
        $region16: #{tpu_custom_call.1} parent=11 // pred_fallthru
          _
        // Predicated region
        $region17: #{tpu_custom_call.1} parent=11 // pred_check
          %p175 = pneg %p129
        $region18: #{tpu_custom_call.1} parent=11 // pred_check_branch
          %177 = sbr.rel (%p175) target = $region20
        $region19: #{tpu_custom_call.1} parent=11 // pred_region
          _
        $region20: #{tpu_custom_call.1} parent=11 // pred_fallthru
          _
      $region12: #{tpu_custom_call.1} parent=5 // pred_fallthru
        _
      %p178 = scmp.lt.s32.totalorder %s19, 2
      // Predicated region
      $region21: #{tpu_custom_call.1} parent=5 // pred_check
        %p179 = pneg %p178
      $region22: #{tpu_custom_call.1} parent=5 // pred_check_branch
        %181 = sbr.rel (%p179) target = $region24
      $region23: #{tpu_custom_call.1} parent=5 // pred_region
        // Predicated region
        $region25: #{tpu_custom_call.1} parent=23 // pred_check
          %p182 = pneg %p53
        $region26: #{tpu_custom_call.1} parent=23 // pred_check_branch
          %184 = sbr.rel (%p182) target = $region28
        $region27: #{tpu_custom_call.1} parent=23 // pred_region
          %s185 = sand.u32 %s43, 1
          %s186 = scalar_lea.sflag [#allocation3], %s185
          %s187 = sand.u32 %s43, 1
          %s188 = smul.addr %s187, 16
          %s189 = scalar_lea.vmem [#allocation2], %s188
          %s190 = smul.u32 2, %s27
          %s192 = ssub.s32 256, 256
          %193 = vsyncadd %s186, %s192
          %s194 = smul.addr %s26, 2
          %s195 = sadd.s32 %s190, %s194
          %s196 = smul.addr %s195, 128
          %s197 = scalar_lea.hbm %s0, %s196
          %s199 = sshll.u32 %s189, 4
          %s200 = int_to_ptr.vmem [resolvable:$true] %s199
          %202 = dma.hbm_to_vmem [thread:$0]  %s197, 256, %s200, %s186
        $region28: #{tpu_custom_call.1} parent=23 // pred_fallthru
          _
        // Predicated region
        $region29: #{tpu_custom_call.1} parent=23 // pred_check
          %p203 = pneg %p81
        $region30: #{tpu_custom_call.1} parent=23 // pred_check_branch
          %205 = sbr.rel (%p203) target = $region32
        $region31: #{tpu_custom_call.1} parent=23 // pred_region
          %s206 = sand.u32 %s71, 1
          %s207 = scalar_lea.sflag [#allocation6], %s206
          %s208 = sand.u32 %s71, 1
          %s209 = smul.addr %s208, 32
          %s210 = scalar_lea.vmem [#allocation5], %s209
          %s211 = smul.u32 2, %s27
          %s213 = ssub.s32 512, 512
          %214 = vsyncadd %s207, %s213
          %s215 = smul.addr %s26, 4
          %s216 = sadd.s32 %s211, %s215
          %s217 = smul.addr %s216, 128
          %s218 = scalar_lea.hbm %s1, %s217
          %s219 = sshll.u32 %s210, 4
          %s220 = int_to_ptr.vmem [resolvable:$true] %s219
          %225 = dma.hbm_to_vmem [thread:$0]  %s218, 512, %s220, %s207, 256, 256, 16
        $region32: #{tpu_custom_call.1} parent=23 // pred_fallthru
          _
      $region24: #{tpu_custom_call.1} parent=5 // pred_fallthru
        _
      %p226 = scmp.le.s32.totalorder 1, %s19
      %p227 = scmp.lt.s32.totalorder %s19, 3
      %p228 = pnand %p226, %p227
      %p229 = pneg %p228
      // Predicated region
      $region33: #{tpu_custom_call.1} parent=5 // pred_check
        _
      $region34: #{tpu_custom_call.1} parent=5 // pred_check_branch
        %231 = sbr.rel (%p228) target = $region36
      $region35: #{tpu_custom_call.1} parent=5 // pred_region
        %s232 = ssub.s32 %s19, 1
        %s233 = sand.u32 %s46, 1
        %s234 = scalar_lea.sflag [#allocation3], %s233
        %s235 = sand.u32 %s46, 1
        %s236 = smul.addr %s235, 16
        %s237 = scalar_lea.vmem [#allocation2], %s236
        // Predicated region
        $region37: #{tpu_custom_call.1} parent=35 // pred_check
          %p238 = pneg %p59
        $region38: #{tpu_custom_call.1} parent=35 // pred_check_branch
          %240 = sbr.rel (%p238) target = $region40
        $region39: #{tpu_custom_call.1} parent=35 // pred_region
          %241 = dma.done %s234, 256
        $region40: #{tpu_custom_call.1} parent=35 // pred_fallthru
          _
        %s242 = sand.u32 %s74, 1
        %s243 = scalar_lea.sflag [#allocation6], %s242
        %s244 = sand.u32 %s74, 1
        %s245 = smul.addr %s244, 32
        %s246 = scalar_lea.vmem [#allocation5], %s245
        // Predicated region
        $region41: #{tpu_custom_call.1} parent=35 // pred_check
          %p247 = pneg %p87
        $region42: #{tpu_custom_call.1} parent=35 // pred_check_branch
          %249 = sbr.rel (%p247) target = $region44
        $region43: #{tpu_custom_call.1} parent=35 // pred_region
          %250 = dma.done %s243, 512
        $region44: #{tpu_custom_call.1} parent=35 // pred_fallthru
          _
        %s251 = sand.u32 %s46, 1
        %s252 = scalar_lea.sflag [#allocation3], %s251
        %s253 = sand.u32 %s46, 1
        %s254 = smul.addr %s253, 16
        %s255 = scalar_lea.vmem [#allocation2], %s254
        %p256 = pneg %p59
        %p257 = pneg %p56
        %s258 = sand.u32 %s74, 1
        %s259 = scalar_lea.sflag [#allocation6], %s258
        %s260 = sand.u32 %s74, 1
        %s261 = smul.addr %s260, 32
        %s262 = scalar_lea.vmem [#allocation5], %s261
        %p263 = pneg %p87
        %p264 = pneg %p84
        %p265 = pneg %p108
        %p266 = pneg %p105
        %p267 = pneg %p129
        %p268 = pneg %p126
        %p269 = pneg %p157
        %p270 = pneg %p154
        %s271 = sand.u32 %s144, 1
        %s272 = scalar_lea.sflag [#allocation4], %s271
        %s273 = sand.u32 %s144, 1
        %s274 = smul.addr %s273, 32
        %s275 = scalar_lea.vmem [#allocation7], %s274
        %s276 = smul.u32 2, %s29
        %s277 = smul.u32 2, %s29
        %s278 = smul.u32 2, %s29
        %v279 = vld [vmem:[%s2] sm:$0xff]
        %v280 = vld [vmem:[%s246] sm:$0xff]
        %v281 = vld [vmem:[%s246 + $0x8] sm:$0xff]
        %v282 = vld [vmem:[%s246 + $0x10] sm:$0xff]
        %v283 = vld [vmem:[%s246 + $0x18] sm:$0xff]
        %v284 = vld [vmem:[%s3] sm:$0xff]
        %286 = vset.pattern.permute.xlu0 0
        %287 = vperm.xlu0 %286, %v284
        %v288 = vpop.permute.xlu0 %287
        %vm290 = vcmask 130048
        %v292 = vsel %vm290, %v279, 0
        %294 = vmatprep.subr.mxu0 %v281
        %295 = vmatpush1.msra.mxu0 %v280
        %296 = vmatprep.subr.mxu0 %v283
        %297 = vmatpush1.msra.mxu0 %v282
        %298 = vmatprep.subr.mxu0 0.0
        %299 = vmatpush1.msra.mxu0 0.0
        %300 = vmatprep.subr.mxu0 0.0
        %301 = vmatpush1.msra.mxu0 0.0
        %302 = vmatprep.subr.mxu0 0.0
        %303 = vmatpush1.msra.mxu0 0.0
        %304 = vmatprep.subr.mxu0 0.0
        %305 = vmatpush1.msra.mxu0 0.0
        %306 = vmatprep.subr.mxu0 0.0
        %307 = vmatpush1.msra.mxu0 0.0
        %308 = vmatprep.subr.mxu0 0.0
        %309 = vmatpush1.msra.mxu0 0.0
        %310 = vmatprep.subr.mxu0 0.0
        %311 = vmatpush1.msra.mxu0 0.0
        %312 = vmatprep.subr.mxu0 0.0
        %313 = vmatpush1.msra.mxu0 0.0
        %314 = vmatprep.subr.mxu0 0.0
        %315 = vmatpush1.msra.mxu0 0.0
        %316 = vmatprep.subr.mxu0 0.0
        %317 = vmatpush1.msra.mxu0 0.0
        %318 = vmatprep.subr.mxu0 0.0
        %319 = vmatpush1.msra.mxu0 0.0
        %320 = vmatprep.subr.mxu0 0.0
        %321 = vmatpush1.msra.mxu0 0.0
        %322 = vmatprep.subr.mxu0 0.0
        %323 = vmatpush1.msra.mxu0 0.0
        %324 = vmatprep.subr.mxu0 0.0
        %325 = vmatpush1.msra.mxu0 0.0
        %326 = vmatprep.subr.mxu0 0.0
        %327 = vmatpush1.msra.mxu0 0.0
        %328 = vmatprep.subr.mxu0 0.0
        %329 = vmatpush1.msra.mxu0 0.0
        %330 = vmatprep.subr.mxu0 0.0
        %331 = vmatpush1.msra.mxu0 0.0
        %332 = vmatprep.subr.mxu0 0.0
        %333 = vmatpush1.msra.mxu0 0.0
        %334 = vmatprep.subr.mxu0 0.0
        %335 = vmatpush1.msra.mxu0 0.0
        %336 = vmatprep.subr.mxu0 0.0
        %337 = vmatpush1.msra.mxu0 0.0
        %338 = vmatprep.subr.mxu0 0.0
        %339 = vmatpush1.msra.mxu0 0.0
        %340 = vmatprep.subr.mxu0 0.0
        %341 = vmatpush1.msra.mxu0 0.0
        %342 = vmatprep.subr.mxu0 0.0
        %343 = vmatpush1.msra.mxu0 0.0
        %344 = vmatprep.subr.mxu0 0.0
        %345 = vmatpush1.msra.mxu0 0.0
        %346 = vmatprep.subr.mxu0 0.0
        %347 = vmatpush1.msra.mxu0 0.0
        %348 = vmatprep.subr.mxu0 0.0
        %349 = vmatpush1.msra.mxu0 0.0
        %350 = vmatprep.subr.mxu0 0.0
        %351 = vmatpush1.msra.mxu0 0.0
        %352 = vmatprep.subr.mxu0 0.0
        %353 = vmatpush1.msra.mxu0 0.0
        %354 = vmatprep.subr.mxu0 0.0
        %355 = vmatpush1.msra.mxu0 0.0
        %356 = vmatprep.subr.mxu0 0.0
        %357 = vmatpush1.msra.mxu0 0.0
        %358 = vmatprep.mubr.f32.mxu0 0.0
        %359 = vmatmul.mubr.f32.gmra.mrb[0].mxu0 %v292
        %v360 = vpop.f32.mrb[0].mxu0
        %v361 = vadd.f32 %v288, %v360
        %v362 = vpop.f32.mrb[0].mxu0
        %v363 = vadd.f32 %v288, %v362
        %364 = vdwg.mxu0
        %vm365 = vcmp.ge.f32.partialorder %v361, 0.0
        %vm366 = vcmp.ge.f32.partialorder %v363, 0.0
        %v367 = vmul.f32 %v361, 0.1
        %v368 = vmul.f32 %v363, 0.1
        %v369 = vsel %vm365, %v361, %v367
        %v370 = vsel %vm366, %v363, %v368
        %v371 = vld [vmem:[%s237] sm:$0xff]
        %v372 = vld [vmem:[%s237 + $0x8] sm:$0xff]
        %373 = vst [vmem:[%s275] sm:$0xff] %v371
        %374 = vst [vmem:[%s275 + $0x8] sm:$0xff] %v372
        %375 = vst [vmem:[%s275 + $0x10] sm:$0xff] %v369
        %376 = vst [vmem:[%s275 + $0x18] sm:$0xff] %v370
        %s377 = sand.u32 %s144, 1
        %s378 = scalar_lea.sflag [#allocation4], %s377
        %s379 = sand.u32 %s144, 1
        %s380 = smul.addr %s379, 32
        %s381 = scalar_lea.vmem [#allocation7], %s380
        // Predicated region
        $region45: #{tpu_custom_call.1} parent=35 // pred_check
          %p382 = pneg %p154
        $region46: #{tpu_custom_call.1} parent=35 // pred_check_branch
          %384 = sbr.rel (%p382) target = $region48
        $region47: #{tpu_custom_call.1} parent=35 // pred_region
          %s385 = smul.u32 2, %s29
          %s387 = ssub.s32 512, 512
          %388 = vsyncadd %s378, %s387
          %s389 = smul.addr %s28, 4
          %s390 = sadd.s32 %s385, %s389
          %s391 = smul.addr %s390, 128
          %s392 = scalar_lea.hbm %s4, %s391
          %s393 = sshll.u32 %s381, 4
          %s394 = int_to_ptr.vmem [resolvable:$true] %s393
          %399 = dma.vmem_to_hbm [thread:$0]  %s394, 512, %s392, %s378, 256, 256, 16
        $region48: #{tpu_custom_call.1} parent=35 // pred_fallthru
          _
      $region36: #{tpu_custom_call.1} parent=5 // pred_fallthru
        _
      %p400 = scmp.le.s32.totalorder 2, %s19
      // Predicated region
      $region49: #{tpu_custom_call.1} parent=5 // pred_check
        %p401 = pneg %p400
      $region50: #{tpu_custom_call.1} parent=5 // pred_check_branch
        %403 = sbr.rel (%p401) target = $region52
      $region51: #{tpu_custom_call.1} parent=5 // pred_region
        %s404 = ssub.s32 %s19, 2
        // Predicated region
        $region53: #{tpu_custom_call.1} parent=51 // pred_check
          %p405 = pneg %p160
        $region54: #{tpu_custom_call.1} parent=51 // pred_check_branch
          %407 = sbr.rel (%p405) target = $region56
        $region55: #{tpu_custom_call.1} parent=51 // pred_region
          %s408 = sand.u32 %s145, 1
          %s409 = scalar_lea.sflag [#allocation4], %s408
          %s410 = sand.u32 %s145, 1
          %s411 = smul.addr %s410, 32
          %s412 = scalar_lea.vmem [#allocation7], %s411
          %413 = dma.done %s409, 512
        $region56: #{tpu_custom_call.1} parent=51 // pred_fallthru
          _
      $region52: #{tpu_custom_call.1} parent=5 // pred_fallthru
        _
    $region6: #{tpu_custom_call.1} parent=1 // loop_footer
      %s23 = sadd.s32 1, %s19
    $region7: #{tpu_custom_call.1} parent=1 // loop_footer_branch
      %18 = sbr.rel target = $region3
    $region8: #{tpu_custom_call.1} parent=1 // loop_exit
      _
    %414 = vsyncpa [#allocation3], 1
    %s415 = scalar_lea.sflag [#allocation3], 1
    %416 = vsyncpa %s415, 1
    %417 = vsyncpa [#allocation6], 1
    %s418 = scalar_lea.sflag [#allocation6], 1
    %419 = vsyncpa %s418, 1
    %420 = vsyncpa [#allocation4], 1
    %s421 = scalar_lea.sflag [#allocation4], 1
    %422 = vsyncpa %s421, 1

</llo_original>
